<compile_context>
chip_gen: v5e
topology: v5e:2x2
jax: 0.10.0
libtpu: 0.0.40
codegen_flags: <defaults>
</compile_context>

<pallas_src>
import functools

import jax
import jax.numpy as jnp
from jax import lax
from jax.experimental import pallas as pl
from jax.experimental.pallas import tpu as pltpu

_LANES = 128   # lane width: hidden (50) and n_actions are padded up to this
_ALIGN = 16    # sublane alignment for blob sections (bf16 packs 16 rows/tile)


def _round_up(n, m):
    return (n + m - 1) // m * m


def _obs_pad(obs_dim):
    # +1 row/column for the folded-bias constant-1 feature.
    return _round_up(obs_dim + 1, _ALIGN)


def _qfunction_kernel(x_ref, p_ref, out_ref, *, obs_pad, n_actions):
    pdt = p_ref.dtype
    x = x_ref[...]                                           # (B, obs_pad) bf16

    # Static, sublane-aligned slices of the packed parameter blob.
    w1 = p_ref[0:obs_pad, :]                                 # (obs_pad, 128)
    w2 = p_ref[obs_pad:obs_pad + _LANES, :]                  # (128, 128)
    w3 = p_ref[obs_pad + _LANES:obs_pad + 2 * _LANES, :]     # (128, 128)

    # Three fused matmuls; biases are folded into the weight rows (the
    # constant-1 lane rides along in column `hidden` of h1/h2), so there are
    # no bias slices / broadcast adds between the dependent MXU ops.
    h1 = jnp.maximum(jnp.dot(x, w1, preferred_element_type=jnp.float32), 0.0)
    h2 = jnp.maximum(
        jnp.dot(h1.astype(pdt), w2, preferred_element_type=jnp.float32), 0.0)
    q = jnp.dot(h2.astype(pdt), w3, preferred_element_type=jnp.float32)  # (B,128)

    # Fused DiscreteActionValue bookkeeping: per-row max and greedy action,
    # packed into spare padding lanes of the single lane-dense output slab.
    lane = lax.broadcasted_iota(jnp.int32, q.shape, 1)
    valid = lane < n_actions
    q_m = jnp.where(valid, q, -jnp.inf)
    mx = jnp.max(q_m, axis=1, keepdims=True)                 # (B, 1)
    arg = jnp.min(jnp.where(q_m == mx, lane, q.shape[1]),
                  axis=1, keepdims=True)                     # first max index

    out = jnp.where(lane == n_actions, mx, q)                # q padding == 0
    out = jnp.where(lane == n_actions + 1, arg.astype(jnp.float32), out)
    out_ref[...] = out


def pack_params(params, obs_dim, n_actions, hidden=50,
                param_dtype=jnp.bfloat16):
    """Pack w1/b1/w2/b2/w3/b3 into one zero-padded (rows, 128) bf16 blob.

    Biases are folded in as extra weight rows; the constant-1 feature lane is
    column `obs_dim` of x and column `hidden` of h1/h2.
    """
    assert hidden + 1 <= _LANES, "hidden must leave one padding lane"
    assert n_actions + 2 <= _LANES, "need two spare lanes for max/argmax"
    obs_pad = _obs_pad(obs_dim)
    total = obs_pad + 2 * _LANES
    blob = jnp.zeros((total, _LANES), jnp.float32)

    # Layer 1: rows [0, obs_pad); bias row at `obs_dim`.
    blob = blob.at[0:obs_dim, 0:hidden].set(params["w1_t"])
    blob = blob.at[obs_dim, 0:hidden].set(params["b1"][0])
    blob = blob.at[obs_dim, hidden].set(1.0)      # 1.0 -> h1 lane `hidden`

    # Layer 2: rows [obs_pad, obs_pad + 128); bias row at `hidden`.
    o2 = obs_pad
    blob = blob.at[o2:o2 + hidden, 0:hidden].set(params["w2_t"])
    blob = blob.at[o2 + hidden, 0:hidden].set(params["b2"][0])
    blob = blob.at[o2 + hidden, hidden].set(1.0)  # keep 1.0 alive in h2

    # Layer 3: rows [obs_pad + 128, obs_pad + 256); bias row at `hidden`.
    o3 = obs_pad + _LANES
    blob = blob.at[o3:o3 + hidden, 0:n_actions].set(params["w3_t"])
    blob = blob.at[o3 + hidden, 0:n_actions].set(params["b3"][0])
    return blob.astype(param_dtype)


def qfunction_forward(x, param_blob, *, obs_dim, n_actions,
                      param_dtype=jnp.bfloat16):
    """x: (B, obs_dim) f32. param_blob: pack_params(...) output.

    Returns the packed (B, 128) f32 slab; use unpack_qvalues() (inside the
    caller's jit) to extract q / max_q / greedy_actions.
    """
    assert n_actions + 2 <= _LANES
    obs_pad = _obs_pad(obs_dim)
    B = x.shape[0]

    # Build the lane-padded bf16 input with the constant-1 bias feature at
    # column `obs_dim`. Done here so it fuses into the caller's jit.
    pieces = [x, jnp.ones((B, 1), x.dtype)]
    pad = obs_pad - obs_dim - 1
    if pad:
        pieces.append(jnp.zeros((B, pad), x.dtype))
    x_aug = jnp.concatenate(pieces, axis=1).astype(param_dtype)

    kernel = functools.partial(_qfunction_kernel,
                               obs_pad=obs_pad, n_actions=n_actions)
    vmem = pl.BlockSpec(memory_space=pltpu.MemorySpace.VMEM)
    slab = pl.pallas_call(
        kernel,
        out_shape=jax.ShapeDtypeStruct((B, _LANES), jnp.float32),
        in_specs=[vmem, vmem],
        out_specs=vmem,
    )(x_aug, param_blob)
    return slab


def unpack_qvalues(slab, n_actions):
    """Slice the packed slab into DiscreteActionValue contents (fuses in jit)."""
    return {
        "q": slab[:, :n_actions],
        "max_q": slab[:, n_actions],
        "greedy_actions": slab[:, n_actions + 1].astype(jnp.int32),
    }


def init_params(key, obs_dim, n_actions, hidden=50):
    """Deterministic init matching torch.nn.Linear (weights stored transposed)."""
    ks = jax.random.split(key, 6)

    def linear(kw, kb, fan_in, fan_out):
        bound = 1.0 / jnp.sqrt(jnp.float32(fan_in))
        w = jax.random.uniform(kw, (fan_in, fan_out), jnp.float32, -bound, bound)
        b = jax.random.uniform(kb, (1, fan_out), jnp.float32, -bound, bound)
        return w, b

    w1, b1 = linear(ks[0], ks[1], obs_dim, hidden)
    w2, b2 = linear(ks[2], ks[3], hidden, hidden)
    w3, b3 = linear(ks[4], ks[5], hidden, n_actions)
    return {"w1_t": w1, "b1": b1, "w2_t": w2, "b2": b2, "w3_t": w3, "b3": b3}


def reference_forward(x, params, param_dtype=jnp.bfloat16):
    """Pure-JAX reference using the same bf16-quantized values as the kernel."""
    f = lambda a: a.astype(param_dtype).astype(jnp.float32)
    hp = jax.lax.Precision.HIGHEST
    h = jnp.maximum(jnp.dot(f(x), f(params["w1_t"]), precision=hp)
                    + f(params["b1"]), 0.0)
    h = jnp.maximum(jnp.dot(f(h), f(params["w2_t"]), precision=hp)
                    + f(params["b2"]), 0.0)
    return jnp.dot(f(h), f(params["w3_t"]), precision=hp) + f(params["b3"])


if __name__ == "__main__":
    key = jax.random.PRNGKey(0)
    k_x, k_p = jax.random.split(key)

    B, obs_dim, n_actions = 8, 32, 4
    x = jax.random.normal(k_x, (B, obs_dim), jnp.float32)
    params = init_params(k_p, obs_dim, n_actions)
    blob = pack_params(params, obs_dim, n_actions)

    @jax.jit
    def forward(x, blob):
        slab = qfunction_forward(x, blob, obs_dim=obs_dim, n_actions=n_actions)
        return unpack_qvalues(slab, n_actions)

    out = jax.block_until_ready(forward(x, blob))
    q, max_q, actions = out["q"], out["max_q"], out["greedy_actions"]

    q_ref = reference_forward(x, params)
    assert q.shape == (B, n_actions)
    assert jnp.allclose(q, q_ref, atol=5e-3, rtol=5e-3), \
        float(jnp.abs(q - q_ref).max())
    # Fused DiscreteActionValue bookkeeping must be self-consistent with q.
    assert jnp.array_equal(actions, jnp.argmax(q, axis=1).astype(jnp.int32))
    assert jnp.allclose(max_q, jnp.max(q, axis=1), atol=1e-6)

    print("KERNEL_OK")
</pallas_src>

<mosaic_0001>
module attributes {stable_mosaic.version = 11 : i64} {
  func.func @_qfunction_kernel(%arg0: memref<8x48xbf16, #tpu.memory_space<vmem>>, %arg1: memref<304x128xbf16, #tpu.memory_space<vmem>>, %arg2: memref<8x128xf32, #tpu.memory_space<vmem>>) attributes {dimension_semantics = [], scalar_prefetch = 0 : i64, scratch_operands = 0 : i64, tpu.core_type = #tpu.core_type<tc>} {
    %c0 = arith.constant 0 : index
    %c0_0 = arith.constant 0 : index
    %0 = vector.load %arg0[%c0, %c0_0] : memref<8x48xbf16, #tpu.memory_space<vmem>>, vector<8x48xbf16>
    %c0_1 = arith.constant 0 : index
    %c0_2 = arith.constant 0 : index
    %1 = vector.load %arg1[%c0_1, %c0_2] : memref<304x128xbf16, #tpu.memory_space<vmem>>, vector<48x128xbf16>
    %c48 = arith.constant 48 : index
    %c0_3 = arith.constant 0 : index
    %2 = vector.load %arg1[%c48, %c0_3] : memref<304x128xbf16, #tpu.memory_space<vmem>>, vector<128x128xbf16>
    %c176 = arith.constant 176 : index
    %c0_4 = arith.constant 0 : index
    %3 = vector.load %arg1[%c176, %c0_4] : memref<304x128xbf16, #tpu.memory_space<vmem>>, vector<128x128xbf16>
    %cst = arith.constant dense<0.000000e+00> : vector<8x128xf32>
    %4 = tpu.matmul %0, %1, %cst {dimension_numbers = #tpu.dot_dimension_numbers<[1], [0], [0], [1], [0, 0, 1, 1], [], []>} : vector<8x48xbf16>, vector<48x128xbf16>, vector<8x128xf32> -> vector<8x128xf32>
    %cst_5 = arith.constant 0.000000e+00 : f32
    %5 = vector.broadcast %cst_5 : f32 to vector<8x128xf32>
    %6 = arith.maximumf %4, %5 : vector<8x128xf32>
    %7 = arith.truncf %6 : vector<8x128xf32> to vector<8x128xbf16>
    %cst_6 = arith.constant dense<0.000000e+00> : vector<8x128xf32>
    %8 = tpu.matmul %7, %2, %cst_6 {dimension_numbers = #tpu.dot_dimension_numbers<[1], [0], [0], [1], [0, 0, 1, 1], [], []>} : vector<8x128xbf16>, vector<128x128xbf16>, vector<8x128xf32> -> vector<8x128xf32>
    %cst_7 = arith.constant 0.000000e+00 : f32
    %9 = vector.broadcast %cst_7 : f32 to vector<8x128xf32>
    %10 = arith.maximumf %8, %9 : vector<8x128xf32>
    %11 = arith.truncf %10 : vector<8x128xf32> to vector<8x128xbf16>
    %cst_8 = arith.constant dense<0.000000e+00> : vector<8x128xf32>
    %12 = tpu.matmul %11, %3, %cst_8 {dimension_numbers = #tpu.dot_dimension_numbers<[1], [0], [0], [1], [0, 0, 1, 1], [], []>} : vector<8x128xbf16>, vector<128x128xbf16>, vector<8x128xf32> -> vector<8x128xf32>
    %13 = tpu.iota {dimensions = array<i32: 1>} : vector<8x128xi32>
    %c4_i32 = arith.constant 4 : i32
    %14 = vector.broadcast %c4_i32 : i32 to vector<8x128xi32>
    %15 = arith.cmpi slt, %13, %14 : vector<8x128xi32>
    %cst_9 = arith.constant 0xFF800000 : f32
    %16 = vector.broadcast %cst_9 : f32 to vector<8x128xf32>
    %17 = arith.select %15, %12, %16 : vector<8x128xi1>, vector<8x128xf32>
    %cst_10 = arith.constant dense<0xFF800000> : vector<8xf32>
    %18 = vector.multi_reduction <maximumf>, %17, %cst_10 [1] : vector<8x128xf32> to vector<8xf32>
    %19 = vector.shape_cast %18 : vector<8xf32> to vector<8x1xf32>
    %20 = vector.broadcast %19 : vector<8x1xf32> to vector<8x128xf32>
    %21 = arith.cmpf oeq, %17, %20 : vector<8x128xf32>
    %c128_i32 = arith.constant 128 : i32
    %22 = vector.broadcast %c128_i32 : i32 to vector<8x128xi32>
    %23 = arith.select %21, %13, %22 : vector<8x128xi1>, vector<8x128xi32>
    %cst_11 = arith.constant dense<2147483647> : vector<8xi32>
    %24 = vector.multi_reduction <minsi>, %23, %cst_11 [1] : vector<8x128xi32> to vector<8xi32>
    %25 = vector.shape_cast %24 : vector<8xi32> to vector<8x1xi32>
    %c4_i32_12 = arith.constant 4 : i32
    %26 = vector.broadcast %c4_i32_12 : i32 to vector<8x128xi32>
    %27 = arith.cmpi eq, %13, %26 : vector<8x128xi32>
    %28 = vector.shape_cast %19 : vector<8x1xf32> to vector<8x1xf32>
    %29 = vector.broadcast %28 : vector<8x1xf32> to vector<8x128xf32>
    %30 = arith.select %27, %29, %12 : vector<8x128xi1>, vector<8x128xf32>
    %c5_i32 = arith.constant 5 : i32
    %31 = vector.broadcast %c5_i32 : i32 to vector<8x128xi32>
    %32 = arith.cmpi eq, %13, %31 : vector<8x128xi32>
    %33 = arith.sitofp %25 : vector<8x1xi32> to vector<8x1xf32>
    %34 = vector.shape_cast %33 : vector<8x1xf32> to vector<8x1xf32>
    %35 = vector.broadcast %34 : vector<8x1xf32> to vector<8x128xf32>
    %36 = arith.select %32, %35, %30 : vector<8x128xi1>, vector<8x128xf32>
    %c0_13 = arith.constant 0 : index
    %c0_14 = arith.constant 0 : index
    %37 = vector.load %arg2[%c0_13, %c0_14] : memref<8x128xf32, #tpu.memory_space<vmem>>, vector<8x128xf32>
    tpu.vector_store %arg2[%c0_13, %c0_14], %36 {strides = array<i32>} : memref<8x128xf32, #tpu.memory_space<vmem>>, vector<8x128xf32>,
    return
  }
}

</mosaic_0001>

<llo_original>
// kernel: forward.1
$region0: #{forward.1}
  #allocation0 [shape = 'u32[]', space=smem, size = 0x4, offset = 0x4, fixed_abs, tag = 'smem constant byte address 0x4 - core index']
  #allocation1 [shape = 'u32[72,128]{1,0:T(1,128)}', space=vmem, size = 0x9000, scoped, tag = 'internal scratch']
  %s0 = inlined_call_operand.vmem [shape: bf16[8,48], index: 0, kind: input, shape index: {}]
  %s1 = inlined_call_operand.hbm [shape: bf16[304,128], index: 1, kind: input, shape index: {}]
  %s2 = inlined_call_operand.vmem [shape: f32[8,128], index: 2, kind: output, shape index: {}]
  %s3 = sld [smem:[#allocation0]]
  $region22: #{forward.1} parent=0
    _
  %s5 = ssub.s32 1, %s3
  %s6 = scalar_select 0, %s5, %s3
  $region1: #{forward.1} parent=0
    #allocation2 [shape = 'u8[77824]{0}', space=vmem, size = 0x13000, scoped, tag = 'input window, operand 1, single buffered']
    #allocation3 [shape = 's32[1]{0}', space=sflag, size = 0x4, scoped, tag = 'scoped memory for forward.1']
    %7 = vsyncpa [#allocation3], 0
    // Predicated region
    $region2: #{forward.1} parent=1 // pred_check
      _
    $region3: #{forward.1} parent=1 // pred_check_branch
      %9 = sbr.rel (0) target = $region5
    $region4: #{forward.1} parent=1 // pred_region
      _
    $region5: #{forward.1} parent=1 // pred_fallthru
      _
    // Predicated region
    $region6: #{forward.1} parent=1 // pred_check
      _
    $region7: #{forward.1} parent=1 // pred_check_branch
      %11 = sbr.rel (0) target = $region9
    $region8: #{forward.1} parent=1 // pred_region
      %13 = vsyncadd [#allocation3], 0
      %s14 = sshll.u32 %s1, 4
      %s15 = int_to_ptr.hbm [resolvable:$true] %s14
      %s16 = sshll.u32 [#allocation2], 4
      %s17 = int_to_ptr.vmem [resolvable:$true] %s16
      %22 = dma.hbm_to_vmem [thread:$0]  %s15, 2432, %s17, [#allocation3], 64, 64, 4
    $region9: #{forward.1} parent=1 // pred_fallthru
      _
    // Predicated region
    $region10: #{forward.1} parent=1 // pred_check
      _
    $region11: #{forward.1} parent=1 // pred_check_branch
      %24 = sbr.rel (0) target = $region13
    $region12: #{forward.1} parent=1 // pred_region
      %26 = dma.done [#allocation3], 2432
    $region13: #{forward.1} parent=1 // pred_fallthru
      _
    %v28 = vld [vmem:[%s0] sm:$0xf]
    %v29 = vld [vmem:[#allocation2] sm:$0xf]
    %v30 = vld [vmem:[#allocation2 + $0x4] sm:$0xf]
    %v31 = vld [vmem:[#allocation2 + $0x8] sm:$0xf]
    %v32 = vld [vmem:[#allocation2 + $0xc] sm:$0xf]
    %v33 = vld [vmem:[#allocation2 + $0x10] sm:$0xf]
    %v34 = vld [vmem:[#allocation2 + $0x14] sm:$0xf]
    %v35 = vld [vmem:[#allocation2 + $0x18] sm:$0xf]
    %v36 = vld [vmem:[#allocation2 + $0x1c] sm:$0xf]
    %v37 = vld [vmem:[#allocation2 + $0x20] sm:$0xf]
    %v38 = vld [vmem:[#allocation2 + $0x24] sm:$0xf]
    %v39 = vld [vmem:[#allocation2 + $0x28] sm:$0xf]
    %v40 = vld [vmem:[#allocation2 + $0x2c] sm:$0xf]
    %v41 = vld [vmem:[#allocation2 + $0x30] sm:$0xf]
    %v42 = vld [vmem:[#allocation2 + $0x34] sm:$0xf]
    %v43 = vld [vmem:[#allocation2 + $0x38] sm:$0xf]
    %v44 = vld [vmem:[#allocation2 + $0x3c] sm:$0xf]
    %v45 = vld [vmem:[#allocation2 + $0x40] sm:$0xf]
    %v46 = vld [vmem:[#allocation2 + $0x44] sm:$0xf]
    %v47 = vld [vmem:[#allocation2 + $0x48] sm:$0xf]
    %v48 = vld [vmem:[#allocation2 + $0x4c] sm:$0xf]
    %v49 = vld [vmem:[#allocation2 + $0x50] sm:$0xf]
    %v50 = vld [vmem:[#allocation2 + $0x54] sm:$0xf]
    %v51 = vld [vmem:[#allocation2 + $0x58] sm:$0xf]
    %v52 = vld [vmem:[#allocation2 + $0x5c] sm:$0xf]
    %v53 = vld [vmem:[#allocation2 + $0x60] sm:$0xf]
    %v54 = vld [vmem:[#allocation2 + $0x64] sm:$0xf]
    %v55 = vld [vmem:[#allocation2 + $0x68] sm:$0xf]
    %v56 = vld [vmem:[#allocation2 + $0x6c] sm:$0xf]
    %v57 = vld [vmem:[#allocation2 + $0x70] sm:$0xf]
    %v58 = vld [vmem:[#allocation2 + $0x74] sm:$0xf]
    %v59 = vld [vmem:[#allocation2 + $0x78] sm:$0xf]
    %v60 = vld [vmem:[#allocation2 + $0x7c] sm:$0xf]
    %v61 = vld [vmem:[#allocation2 + $0x80] sm:$0xf]
    %v62 = vld [vmem:[#allocation2 + $0x84] sm:$0xf]
    %v63 = vld [vmem:[#allocation2 + $0x88] sm:$0xf]
    %v64 = vld [vmem:[#allocation2 + $0x8c] sm:$0xf]
    %v65 = vld [vmem:[#allocation2 + $0x90] sm:$0xf]
    %v66 = vld [vmem:[#allocation2 + $0x94] sm:$0xf]
    %v73 = vunpack.c.l.b16 %v29
    %v74 = vunpack.c.l.b16 %v30
    %v75 = vunpack.c.l.b16 %v31
    %v76 = vunpack.c.l.b16 %v32
    %v77 = vunpack.c.l.b16 %v33
    %v78 = vunpack.c.l.b16 %v34
    %v79 = vpack.c.b16 %v74, %v73
    %v80 = vpack.c.b16 %v76, %v75
    %v81 = vpack.c.b16 %v78, %v77
    %vm85 = vcmask 392192
    %v87 = vsel %vm85, %v28, 0
    %89 = vmatpush.bf16.msra.mxu0 0
    %90 = vmatpush.bf16.msra.mxu0 0
    %91 = vmatpush.bf16.msra.mxu0 0
    %92 = vmatpush.bf16.msra.mxu0 0
    %93 = vmatpush.bf16.msra.mxu0 0
    %94 = vmatpush.bf16.msra.mxu0 %v81
    %95 = vmatpush.bf16.msra.mxu0 %v80
    %96 = vmatpush.bf16.msra.mxu0 %v79
    %97 = vmatmul.bf16.gmra.mxu0 %v87
    %v98 = vpop.f32.mrf.mxu0
    %v99 = vadd.f32 0.0, %v98
    %v100 = vpop.f32.mrf.mxu0
    %101 = vdwg.mxu0
    %v102 = vmax.f32 %v99, 0.0
    %v103 = vpack.c.bf16 %v102, %v102
    %v120 = vunpack.c.l.b16 %v35
    %v121 = vunpack.c.l.b16 %v36
    %v122 = vunpack.c.l.b16 %v37
    %v123 = vunpack.c.l.b16 %v38
    %v124 = vunpack.c.l.b16 %v39
    %v125 = vunpack.c.l.b16 %v40
    %v126 = vunpack.c.l.b16 %v41
    %v127 = vunpack.c.l.b16 %v42
    %v128 = vunpack.c.l.b16 %v43
    %v129 = vunpack.c.l.b16 %v44
    %v130 = vunpack.c.l.b16 %v45
    %v131 = vunpack.c.l.b16 %v46
    %v132 = vunpack.c.l.b16 %v47
    %v133 = vunpack.c.l.b16 %v48
    %v134 = vunpack.c.l.b16 %v49
    %v135 = vunpack.c.l.b16 %v50
    %v136 = vpack.c.b16 %v121, %v120
    %v137 = vpack.c.b16 %v123, %v122
    %v138 = vpack.c.b16 %v125, %v124
    %v139 = vpack.c.b16 %v127, %v126
    %v140 = vpack.c.b16 %v129, %v128
    %v141 = vpack.c.b16 %v131, %v130
    %v142 = vpack.c.b16 %v133, %v132
    %v143 = vpack.c.b16 %v135, %v134
    %152 = vmatpush.bf16.msra.mxu0 %v143
    %153 = vmatpush.bf16.msra.mxu0 %v142
    %154 = vmatpush.bf16.msra.mxu0 %v141
    %155 = vmatpush.bf16.msra.mxu0 %v140
    %156 = vmatpush.bf16.msra.mxu0 %v139
    %157 = vmatpush.bf16.msra.mxu0 %v138
    %158 = vmatpush.bf16.msra.mxu0 %v137
    %159 = vmatpush.bf16.msra.mxu0 %v136
    %160 = vmatmul.bf16.gmra.mxu0 %v103
    %v161 = vpop.f32.mrf.mxu0
    %v162 = vadd.f32 0.0, %v161
    %v163 = vpop.f32.mrf.mxu0
    %164 = vdwg.mxu0
    %v165 = vmax.f32 %v162, 0.0
    %v166 = vpack.c.bf16 %v165, %v165
    %v183 = vunpack.c.l.b16 %v51
    %v184 = vunpack.c.l.b16 %v52
    %v185 = vunpack.c.l.b16 %v53
    %v186 = vunpack.c.l.b16 %v54
    %v187 = vunpack.c.l.b16 %v55
    %v188 = vunpack.c.l.b16 %v56
    %v189 = vunpack.c.l.b16 %v57
    %v190 = vunpack.c.l.b16 %v58
    %v191 = vunpack.c.l.b16 %v59
    %v192 = vunpack.c.l.b16 %v60
    %v193 = vunpack.c.l.b16 %v61
    %v194 = vunpack.c.l.b16 %v62
    %v195 = vunpack.c.l.b16 %v63
    %v196 = vunpack.c.l.b16 %v64
    %v197 = vunpack.c.l.b16 %v65
    %v198 = vunpack.c.l.b16 %v66
    %v199 = vpack.c.b16 %v184, %v183
    %v200 = vpack.c.b16 %v186, %v185
    %v201 = vpack.c.b16 %v188, %v187
    %v202 = vpack.c.b16 %v190, %v189
    %v203 = vpack.c.b16 %v192, %v191
    %v204 = vpack.c.b16 %v194, %v193
    %v205 = vpack.c.b16 %v196, %v195
    %v206 = vpack.c.b16 %v198, %v197
    %215 = vmatpush.bf16.msra.mxu0 %v206
    %216 = vmatpush.bf16.msra.mxu0 %v205
    %217 = vmatpush.bf16.msra.mxu0 %v204
    %218 = vmatpush.bf16.msra.mxu0 %v203
    %219 = vmatpush.bf16.msra.mxu0 %v202
    %220 = vmatpush.bf16.msra.mxu0 %v201
    %221 = vmatpush.bf16.msra.mxu0 %v200
    %222 = vmatpush.bf16.msra.mxu0 %v199
    %223 = vmatmul.bf16.gmra.mxu0 %v166
    %v224 = vpop.f32.mrf.mxu0
    %v225 = vadd.f32 0.0, %v224
    %v226 = vpop.f32.mrf.mxu0
    %227 = vdwg.mxu0
    %v228 = vlaneseq
    %v229 = vand.u32 %v228, 127
    %vm230 = vcmp.lt.s32.totalorder %v229, 4
    %v231 = vsel %vm230, %v225, -inf
    %232 = vmax.xlane.f32.xlu0 %v231
    %v233 = vpop.xlane.xlu0 %232
    %vm234 = vcmp.eq.f32.partialorder %v231, %v233
    %v235 = vsel %vm234, %v229, 128
    %v236 = vand.u32 %v235, 65535
    %v237 = vshra.s32 %v235, 16
    %v238 = vcvt.s32.f32 %v236
    %v239 = vcvt.s32.f32 %v237
    %240 = vmin.xlane.f32.xlu0 %v239
    %v241 = vpop.xlane.xlu0 %240
    %vm242 = vcmp.eq.f32.partialorder %v239, %v241
    %v243 = vsel %vm242, %v238, inf
    %244 = vmin.xlane.f32.xlu0 %v243
    %v245 = vpop.xlane.xlu0 %244
    %v246 = vcvt.f32.s32 %v245
    %v247 = vcvt.f32.s32 %v241
    %v248 = vshll.u32 %v247, 16
    %v249 = vadd.s32 %v248, %v246
    %vm250 = vcmp.eq.s32.totalorder %v229, 4
    %v251 = vsel %vm250, %v233, %v225
    %vm252 = vcmp.eq.s32.totalorder %v229, 5
    %v253 = vcvt.s32.f32 %v249
    %v254 = vsel %vm252, %v253, %v251
    %255 = vst [vmem:[%s2] sm:$0xff] %v254
    // Predicated region
    $region14: #{forward.1} parent=1 // pred_check
      _
    $region15: #{forward.1} parent=1 // pred_check_branch
      %257 = sbr.rel (0) target = $region17
    $region16: #{forward.1} parent=1 // pred_region
      _
    $region17: #{forward.1} parent=1 // pred_fallthru
      _
    // Predicated region
    $region18: #{forward.1} parent=1 // pred_check
      _
    $region19: #{forward.1} parent=1 // pred_check_branch
      %259 = sbr.rel (0) target = $region21
    $region20: #{forward.1} parent=1 // pred_region
      _
    $region21: #{forward.1} parent=1 // pred_fallthru
      _
    %260 = vsyncpa [#allocation3], 1

</llo_original>
